<compile_context>
chip_gen: v5e
topology: v5e:2x2
jax: 0.10.0
libtpu: 0.0.40
codegen_flags: <defaults>
</compile_context>

<pallas_src>
import jax
import jax.numpy as jnp
from jax.experimental import pallas as pl
from jax.experimental.pallas import tpu as pltpu


def _timestep_embedding_kernel(t_ref, w1_ref, b1_ref, w2_ref, b2_ref, out_ref):
    # ---- mlp1: cast activation to bf16 at the dot input; f32 MXU accum -----
    h = jnp.dot(t_ref[...].astype(jnp.bfloat16), w1_ref[...],
                preferred_element_type=jnp.float32)
    h = h + b1_ref[...]                       # [1, D] broadcast over batch
    # ---- SiLU in f32 (sigmoid on EUP, mul on VPU; both slots have slack) ---
    h = h * jax.nn.sigmoid(h)
    # ---- mlp2: cast to bf16 only at the dot input, accumulate in f32 -------
    y = jnp.dot(h.astype(jnp.bfloat16), w2_ref[...],
                preferred_element_type=jnp.float32)
    y = y + b2_ref[...]
    out_ref[...] = y.astype(out_ref.dtype)


def prepare_timestep_embedding_params(w1, b1, w2, b2):
    """One-time parameter prep (do this at init, NOT per step).

    w1: [freq_embed_dim, dim], b1: [dim]   (pre-transposed, y = x @ W + b)
    w2: [dim, dim],            b2: [dim]
    Returns bf16 weights and f32 row-vector biases ready for the kernel.
    """
    F, D = w1.shape
    assert w2.shape == (D, D) and b1.shape == (D,) and b2.shape == (D,)
    return (w1.astype(jnp.bfloat16),
            b1.astype(jnp.float32).reshape(1, D),
            w2.astype(jnp.bfloat16),
            b2.astype(jnp.float32).reshape(1, D))


def timestep_embedding(timestep, w1_bf, b1_f32, w2_bf, b2_f32):
    """Fused MLP (Linear -> SiLU -> Linear) in one Pallas call.

    timestep: [B, freq_embed_dim] (any float dtype; cast to bf16 in-kernel)
    Other args come from prepare_timestep_embedding_params().
    returns: [B, dim] in timestep.dtype
    """
    B, F = timestep.shape
    D = w1_bf.shape[1]
    assert w1_bf.shape == (F, D)
    assert w2_bf.shape == (D, D)
    assert b1_f32.shape == (1, D) and b2_f32.shape == (1, D)

    out_dtype = timestep.dtype

    # Whole-array VMEM blocks: block_shape == full array dims satisfies the
    # (8,128) tiling rule at every shape used here.
    def full_vmem(shape):
        return pl.BlockSpec(shape, lambda: (0,) * len(shape),
                            memory_space=pltpu.VMEM)

    bytes_accessed = (
        timestep.size * jnp.dtype(timestep.dtype).itemsize   # activation in
        + w1_bf.size * 2 + w2_bf.size * 2                    # bf16 weights
        + b1_f32.size * 4 + b2_f32.size * 4                  # f32 biases
        + B * D * jnp.dtype(out_dtype).itemsize              # output
    )
    cost = pl.CostEstimate(
        flops=2 * B * (F * D + D * D),
        transcendentals=B * D,                                # sigmoid
        bytes_accessed=bytes_accessed,
    )

    return pl.pallas_call(
        _timestep_embedding_kernel,
        out_shape=jax.ShapeDtypeStruct((B, D), out_dtype),
        grid=(),
        in_specs=[
            full_vmem((B, F)),
            full_vmem((F, D)),
            full_vmem((1, D)),
            full_vmem((D, D)),
            full_vmem((1, D)),
        ],
        out_specs=full_vmem((B, D)),
        cost_estimate=cost,
    )(timestep, w1_bf, b1_f32, w2_bf, b2_f32)


def timestep_embedding_ref(timestep, w1, b1, w2, b2):
    h = timestep @ w1 + b1
    h = h * jax.nn.sigmoid(h)
    return h @ w2 + b2


if __name__ == "__main__":
    # Module config: dim=32, freq_embed_dim=256 (default), batch=2.
    B, FREQ, DIM = 2, 256, 32
    key = jax.random.PRNGKey(0)
    k_t, k_w1, k_b1, k_w2, k_b2 = jax.random.split(key, 5)

    timestep = jax.random.normal(k_t, (B, FREQ), dtype=jnp.float32)
    # Deterministic synthetic params (shapes from nn.Linear in __init__),
    # stored pre-transposed as [in_features, out_features].
    w1 = jax.random.normal(k_w1, (FREQ, DIM), dtype=jnp.float32) * 0.02
    b1 = jax.random.normal(k_b1, (DIM,), dtype=jnp.float32) * 0.02
    w2 = jax.random.normal(k_w2, (DIM, DIM), dtype=jnp.float32) * 0.02
    b2 = jax.random.normal(k_b2, (DIM,), dtype=jnp.float32) * 0.02

    # One-time param prep (hoisted out of the per-step path, per perf review).
    params = prepare_timestep_embedding_params(w1, b1, w2, b2)
    params = jax.tree_util.tree_map(jax.block_until_ready, params)

    # Per-step path: a single pallas_call on pre-prepared params.
    step_fn = jax.jit(timestep_embedding)
    out = step_fn(timestep, *params)
    out = jax.block_until_ready(out)
    assert out.shape == (B, DIM)
    assert out.dtype == timestep.dtype

    # f32 reference; kernel uses bf16 matmul inputs with f32 accumulation,
    # so compare with a tolerance that comfortably covers the bf16 rounding.
    ref = timestep_embedding_ref(timestep, w1, b1, w2, b2)
    assert jnp.allclose(out, ref, atol=1e-2, rtol=1e-2), "mismatch vs reference"

    print("KERNEL_OK")
</pallas_src>

<mosaic_0001>
module attributes {stable_mosaic.version = 11 : i64} {
  func.func @_timestep_embedding_kernel(%arg0: memref<2x256xf32, #tpu.memory_space<vmem>>, %arg1: memref<256x32xbf16, #tpu.memory_space<vmem>>, %arg2: memref<1x32xf32, #tpu.memory_space<vmem>>, %arg3: memref<32x32xbf16, #tpu.memory_space<vmem>>, %arg4: memref<1x32xf32, #tpu.memory_space<vmem>>, %arg5: memref<2x32xf32, #tpu.memory_space<vmem>>) attributes {dimension_semantics = [], scalar_prefetch = 0 : i64, scratch_operands = 0 : i64, tpu.core_type = #tpu.core_type<tc>} {
    %c0 = arith.constant 0 : index
    %c0_0 = arith.constant 0 : index
    %0 = vector.load %arg0[%c0, %c0_0] : memref<2x256xf32, #tpu.memory_space<vmem>>, vector<2x256xf32>
    %1 = arith.truncf %0 : vector<2x256xf32> to vector<2x256xbf16>
    %c0_1 = arith.constant 0 : index
    %c0_2 = arith.constant 0 : index
    %2 = vector.load %arg1[%c0_1, %c0_2] : memref<256x32xbf16, #tpu.memory_space<vmem>>, vector<256x32xbf16>
    %cst = arith.constant dense<0.000000e+00> : vector<2x32xf32>
    %3 = tpu.matmul %1, %2, %cst {dimension_numbers = #tpu.dot_dimension_numbers<[1], [0], [0], [1], [0, 0, 1, 1], [], []>} : vector<2x256xbf16>, vector<256x32xbf16>, vector<2x32xf32> -> vector<2x32xf32>
    %c0_3 = arith.constant 0 : index
    %c0_4 = arith.constant 0 : index
    %4 = vector.load %arg2[%c0_3, %c0_4] : memref<1x32xf32, #tpu.memory_space<vmem>>, vector<1x32xf32>
    %5 = vector.broadcast %4 : vector<1x32xf32> to vector<2x32xf32>
    %6 = arith.addf %3, %5 : vector<2x32xf32>
    %7 = arith.negf %6 : vector<2x32xf32>
    %8 = math.exp %7 : vector<2x32xf32>
    %cst_5 = arith.constant 1.000000e+00 : f32
    %9 = vector.broadcast %cst_5 : f32 to vector<2x32xf32>
    %10 = arith.addf %9, %8 : vector<2x32xf32>
    %11 = arith.divf %9, %10 : vector<2x32xf32>
    %12 = arith.mulf %6, %11 : vector<2x32xf32>
    %13 = arith.truncf %12 : vector<2x32xf32> to vector<2x32xbf16>
    %c0_6 = arith.constant 0 : index
    %c0_7 = arith.constant 0 : index
    %14 = vector.load %arg3[%c0_6, %c0_7] : memref<32x32xbf16, #tpu.memory_space<vmem>>, vector<32x32xbf16>
    %cst_8 = arith.constant dense<0.000000e+00> : vector<2x32xf32>
    %15 = tpu.matmul %13, %14, %cst_8 {dimension_numbers = #tpu.dot_dimension_numbers<[1], [0], [0], [1], [0, 0, 1, 1], [], []>} : vector<2x32xbf16>, vector<32x32xbf16>, vector<2x32xf32> -> vector<2x32xf32>
    %c0_9 = arith.constant 0 : index
    %c0_10 = arith.constant 0 : index
    %16 = vector.load %arg4[%c0_9, %c0_10] : memref<1x32xf32, #tpu.memory_space<vmem>>, vector<1x32xf32>
    %17 = vector.broadcast %16 : vector<1x32xf32> to vector<2x32xf32>
    %18 = arith.addf %15, %17 : vector<2x32xf32>
    %c0_11 = arith.constant 0 : index
    %c0_12 = arith.constant 0 : index
    %19 = vector.load %arg5[%c0_11, %c0_12] : memref<2x32xf32, #tpu.memory_space<vmem>>, vector<2x32xf32>
    tpu.vector_store %arg5[%c0_11, %c0_12], %18 {strides = array<i32>} : memref<2x32xf32, #tpu.memory_space<vmem>>, vector<2x32xf32>,
    return
  }
}

</mosaic_0001>

<llo_original>
// kernel: timestep_embedding.1
$region0: #{timestep_embedding.1}
  #allocation0 [shape = 'u32[]', space=smem, size = 0x4, offset = 0x4, fixed_abs, tag = 'smem constant byte address 0x4 - core index']
  #allocation1 [shape = 'u32[72,128]{1,0:T(1,128)}', space=vmem, size = 0x9000, scoped, tag = 'internal scratch']
  %s0 = inlined_call_operand.vmem [shape: f32[2,256], index: 0, kind: input, shape index: {}]
  %s1 = inlined_call_operand.vmem [shape: bf16[256,32], index: 1, kind: input, shape index: {}]
  %s2 = inlined_call_operand.vmem [shape: f32[1,32], index: 2, kind: input, shape index: {}]
  %s3 = inlined_call_operand.vmem [shape: bf16[32,32], index: 3, kind: input, shape index: {}]
  %s4 = inlined_call_operand.vmem [shape: f32[1,32], index: 4, kind: input, shape index: {}]
  %s5 = inlined_call_operand.hbm [shape: f32[2,32], index: 5, kind: output, shape index: {}]
  %s6 = sld [smem:[#allocation0]]
  $region30: #{timestep_embedding.1} parent=0
    _
  %s8 = ssub.s32 1, %s6
  %s9 = scalar_select 0, %s8, %s6
  $region1: #{timestep_embedding.1} parent=0
    #allocation2 [shape = 'u8[1024]{0}', space=vmem, size = 0x400, scoped, tag = 'output window, operand 0, single buffered']
    #allocation3 [shape = 's32[1]{0}', space=sflag, size = 0x4, scoped, tag = 'scoped memory for timestep_embedding.1']
    %10 = vsyncpa [#allocation3], 0
    // Predicated region
    $region2: #{timestep_embedding.1} parent=1 // pred_check
      _
    $region3: #{timestep_embedding.1} parent=1 // pred_check_branch
      %12 = sbr.rel (0) target = $region5
    $region4: #{timestep_embedding.1} parent=1 // pred_region
      _
    $region5: #{timestep_embedding.1} parent=1 // pred_fallthru
      _
    // Predicated region
    $region6: #{timestep_embedding.1} parent=1 // pred_check
      _
    $region7: #{timestep_embedding.1} parent=1 // pred_check_branch
      %14 = sbr.rel (0) target = $region9
    $region8: #{timestep_embedding.1} parent=1 // pred_region
      _
    $region9: #{timestep_embedding.1} parent=1 // pred_fallthru
      _
    // Predicated region
    $region10: #{timestep_embedding.1} parent=1 // pred_check
      _
    $region11: #{timestep_embedding.1} parent=1 // pred_check_branch
      %16 = sbr.rel (0) target = $region13
    $region12: #{timestep_embedding.1} parent=1 // pred_region
      _
    $region13: #{timestep_embedding.1} parent=1 // pred_fallthru
      _
    // Predicated region
    $region14: #{timestep_embedding.1} parent=1 // pred_check
      _
    $region15: #{timestep_embedding.1} parent=1 // pred_check_branch
      %18 = sbr.rel (0) target = $region17
    $region16: #{timestep_embedding.1} parent=1 // pred_region
      _
    $region17: #{timestep_embedding.1} parent=1 // pred_fallthru
      _
    // Predicated region
    $region18: #{timestep_embedding.1} parent=1 // pred_check
      _
    $region19: #{timestep_embedding.1} parent=1 // pred_check_branch
      %20 = sbr.rel (0) target = $region21
    $region20: #{timestep_embedding.1} parent=1 // pred_region
      _
    $region21: #{timestep_embedding.1} parent=1 // pred_fallthru
      _
    %v22 = vld [vmem:[%s0] sm:$0xf]
    %24 = vst [vmem:[#allocation1] ss:$4 sm:$0xff] %v22
    %v25 = vld.sshfl [vmem:[#allocation1] sm:$0xff pattern:$0x73625140]
    %v26 = vld.sshfl [vmem:[#allocation1 + $0x8] sm:$0xff pattern:$0x73625140]
    %v29 = vpack.c.bf16 %v25, %v25
    %v30 = vpack.c.bf16 %v26, %v26
    %v31 = vld [vmem:[%s1] sm:$0xf]
    %v32 = vld [vmem:[%s1 + $0x4] sm:$0xf]
    %v33 = vld [vmem:[%s1 + $0x8] sm:$0xf]
    %v34 = vld [vmem:[%s1 + $0xc] sm:$0xf]
    %v35 = vld [vmem:[%s1 + $0x10] sm:$0xf]
    %v36 = vld [vmem:[%s1 + $0x14] sm:$0xf]
    %v37 = vld [vmem:[%s1 + $0x18] sm:$0xf]
    %v38 = vld [vmem:[%s1 + $0x1c] sm:$0xf]
    %v39 = vld [vmem:[%s1 + $0x20] sm:$0xf]
    %v40 = vld [vmem:[%s1 + $0x24] sm:$0xf]
    %v41 = vld [vmem:[%s1 + $0x28] sm:$0xf]
    %v42 = vld [vmem:[%s1 + $0x2c] sm:$0xf]
    %v43 = vld [vmem:[%s1 + $0x30] sm:$0xf]
    %v44 = vld [vmem:[%s1 + $0x34] sm:$0xf]
    %v45 = vld [vmem:[%s1 + $0x38] sm:$0xf]
    %v46 = vld [vmem:[%s1 + $0x3c] sm:$0xf]
    %v47 = vld [vmem:[%s1 + $0x40] sm:$0xf]
    %v48 = vld [vmem:[%s1 + $0x44] sm:$0xf]
    %v49 = vld [vmem:[%s1 + $0x48] sm:$0xf]
    %v50 = vld [vmem:[%s1 + $0x4c] sm:$0xf]
    %v51 = vld [vmem:[%s1 + $0x50] sm:$0xf]
    %v52 = vld [vmem:[%s1 + $0x54] sm:$0xf]
    %v53 = vld [vmem:[%s1 + $0x58] sm:$0xf]
    %v54 = vld [vmem:[%s1 + $0x5c] sm:$0xf]
    %v55 = vld [vmem:[%s1 + $0x60] sm:$0xf]
    %v56 = vld [vmem:[%s1 + $0x64] sm:$0xf]
    %v57 = vld [vmem:[%s1 + $0x68] sm:$0xf]
    %v58 = vld [vmem:[%s1 + $0x6c] sm:$0xf]
    %v59 = vld [vmem:[%s1 + $0x70] sm:$0xf]
    %v60 = vld [vmem:[%s1 + $0x74] sm:$0xf]
    %v61 = vld [vmem:[%s1 + $0x78] sm:$0xf]
    %v62 = vld [vmem:[%s1 + $0x7c] sm:$0xf]
    %v63 = vld [vmem:[%s2] sm:$0x1]
    %v65 = vperm.slane %v63, 0
    %v99 = vunpack.c.l.b16 %v31
    %v100 = vunpack.c.l.b16 %v32
    %v101 = vunpack.c.l.b16 %v33
    %v102 = vunpack.c.l.b16 %v34
    %v103 = vunpack.c.l.b16 %v35
    %v104 = vunpack.c.l.b16 %v36
    %v105 = vunpack.c.l.b16 %v37
    %v106 = vunpack.c.l.b16 %v38
    %v107 = vunpack.c.l.b16 %v39
    %v108 = vunpack.c.l.b16 %v40
    %v109 = vunpack.c.l.b16 %v41
    %v110 = vunpack.c.l.b16 %v42
    %v111 = vunpack.c.l.b16 %v43
    %v112 = vunpack.c.l.b16 %v44
    %v113 = vunpack.c.l.b16 %v45
    %v114 = vunpack.c.l.b16 %v46
    %v115 = vunpack.c.l.b16 %v47
    %v116 = vunpack.c.l.b16 %v48
    %v117 = vunpack.c.l.b16 %v49
    %v118 = vunpack.c.l.b16 %v50
    %v119 = vunpack.c.l.b16 %v51
    %v120 = vunpack.c.l.b16 %v52
    %v121 = vunpack.c.l.b16 %v53
    %v122 = vunpack.c.l.b16 %v54
    %v123 = vunpack.c.l.b16 %v55
    %v124 = vunpack.c.l.b16 %v56
    %v125 = vunpack.c.l.b16 %v57
    %v126 = vunpack.c.l.b16 %v58
    %v127 = vunpack.c.l.b16 %v59
    %v128 = vunpack.c.l.b16 %v60
    %v129 = vunpack.c.l.b16 %v61
    %v130 = vunpack.c.l.b16 %v62
    %v131 = vpack.c.b16 %v100, %v99
    %v132 = vpack.c.b16 %v102, %v101
    %v133 = vpack.c.b16 %v104, %v103
    %v134 = vpack.c.b16 %v106, %v105
    %v135 = vpack.c.b16 %v108, %v107
    %v136 = vpack.c.b16 %v110, %v109
    %v137 = vpack.c.b16 %v112, %v111
    %v138 = vpack.c.b16 %v114, %v113
    %v139 = vpack.c.b16 %v116, %v115
    %v140 = vpack.c.b16 %v118, %v117
    %v141 = vpack.c.b16 %v120, %v119
    %v142 = vpack.c.b16 %v122, %v121
    %v143 = vpack.c.b16 %v124, %v123
    %v144 = vpack.c.b16 %v126, %v125
    %v145 = vpack.c.b16 %v128, %v127
    %v146 = vpack.c.b16 %v130, %v129
    %163 = vmatpush.bf16.msra.mxu0 %v138
    %164 = vmatpush.bf16.msra.mxu0 %v137
    %165 = vmatpush.bf16.msra.mxu0 %v136
    %166 = vmatpush.bf16.msra.mxu0 %v135
    %167 = vmatpush.bf16.msra.mxu0 %v134
    %168 = vmatpush.bf16.msra.mxu0 %v133
    %169 = vmatpush.bf16.msra.mxu0 %v132
    %170 = vmatpush.bf16.msra.mxu0 %v131
    %171 = vmatmul.bf16.gmra.mxu0 %v29
    %v172 = vpop.f32.mrf.mxu0
    %v173 = vadd.f32 %v65, %v172
    %v174 = vpop.f32.mrf.mxu0
    %175 = vdwg.mxu0
    %176 = vmatpush.bf16.msra.mxu0 %v146
    %177 = vmatpush.bf16.msra.mxu0 %v145
    %178 = vmatpush.bf16.msra.mxu0 %v144
    %179 = vmatpush.bf16.msra.mxu0 %v143
    %180 = vmatpush.bf16.msra.mxu0 %v142
    %181 = vmatpush.bf16.msra.mxu0 %v141
    %182 = vmatpush.bf16.msra.mxu0 %v140
    %183 = vmatpush.bf16.msra.mxu0 %v139
    %184 = vmatmul.bf16.gmra.mxu0 %v30
    %v185 = vpop.f32.mrf.mxu0
    %v186 = vadd.f32 %v173, %v185
    %v187 = vpop.f32.mrf.mxu0
    %188 = vdwg.mxu0
    %v189 = vxor.u32 %v186, 2147483648
    %v190 = vmul.f32 %v189, 1.442695
    %v191 = vpow.pop %v190
    %v192 = vadd.f32 %v191, 1.0
    %v193 = vrcp.pop %v192
    %v194 = vmul.f32 %v192, %v193
    %v195 = vsub.f32 1.0, %v194
    %v196 = vmul.f32 %v193, %v195
    %v197 = vadd.f32 %v193, %v196
    %vm198 = vweird.f32 %v192
    %vm199 = vweird.f32 %v193
    %vm200 = vmor %vm198, %vm199
    %v201 = vsel %vm200, %v193, %v197
    %v202 = vand.u32 2147483647, %v192
    %vm203 = vcmp.eq.f32.partialorder %v202, 8.507059e+37
    %v204 = vand.u32 %v192, 2147483648
    %v205 = vor.u32 1.1754944e-38, %v204
    %v206 = vsel %vm203, %v205, %v201
    %v207 = vmul.f32 1.0, %v206
    %v208 = vmul.f32 %v186, %v207
    %v209 = vpack.c.bf16 %v208, %v208
    %v210 = vld [vmem:[%s3] sm:$0xf]
    %v211 = vld [vmem:[%s3 + $0x4] sm:$0xf]
    %v212 = vld [vmem:[%s3 + $0x8] sm:$0xf]
    %v213 = vld [vmem:[%s3 + $0xc] sm:$0xf]
    %v214 = vld [vmem:[%s4] sm:$0x1]
    %v216 = vperm.slane %v214, 0
    %v222 = vunpack.c.l.b16 %v210
    %v223 = vunpack.c.l.b16 %v211
    %v224 = vunpack.c.l.b16 %v212
    %v225 = vunpack.c.l.b16 %v213
    %v226 = vpack.c.b16 %v223, %v222
    %v227 = vpack.c.b16 %v225, %v224
    %vm230 = vcmask 261120
    %v232 = vsel %vm230, %v209, 0
    %234 = vmatpush.bf16.msra.mxu0 0
    %235 = vmatpush.bf16.msra.mxu0 0
    %236 = vmatpush.bf16.msra.mxu0 0
    %237 = vmatpush.bf16.msra.mxu0 0
    %238 = vmatpush.bf16.msra.mxu0 0
    %239 = vmatpush.bf16.msra.mxu0 0
    %240 = vmatpush.bf16.msra.mxu0 %v227
    %241 = vmatpush.bf16.msra.mxu0 %v226
    %242 = vmatmul.bf16.gmra.mxu0 %v232
    %v243 = vpop.f32.mrf.mxu0
    %v244 = vadd.f32 %v216, %v243
    %v245 = vpop.f32.mrf.mxu0
    %246 = vdwg.mxu0
    %vm247 = vcmask 254976
    %248 = vst.msk [vmem:[#allocation2] sm:$0x3] %vm247, %v244
    // Predicated region
    $region22: #{timestep_embedding.1} parent=1 // pred_check
      _
    $region23: #{timestep_embedding.1} parent=1 // pred_check_branch
      %250 = sbr.rel (0) target = $region25
    $region24: #{timestep_embedding.1} parent=1 // pred_region
      %252 = vsyncadd [#allocation3], 0
      %s254 = sshll.u32 [#allocation2], 4
      %s255 = int_to_ptr.vmem [resolvable:$true] %s254
      %s256 = sshll.u32 %s5, 4
      %s257 = int_to_ptr.hbm [resolvable:$true] %s256
      %259 = dma.vmem_to_hbm [thread:$0]  %s255, 32, %s257, [#allocation3]
    $region25: #{timestep_embedding.1} parent=1 // pred_fallthru
      _
    // Predicated region
    $region26: #{timestep_embedding.1} parent=1 // pred_check
      _
    $region27: #{timestep_embedding.1} parent=1 // pred_check_branch
      %261 = sbr.rel (0) target = $region29
    $region28: #{timestep_embedding.1} parent=1 // pred_region
      %263 = dma.done [#allocation3], 32
    $region29: #{timestep_embedding.1} parent=1 // pred_fallthru
      _
    %264 = vsyncpa [#allocation3], 1

</llo_original>
